<compile_context>
chip_gen: v7x
topology: tpu7x:2x2x1
jax: 0.10.0
libtpu: 0.0.40
codegen_flags: <defaults>
</compile_context>

<pallas_src>
import functools

import jax
import jax.numpy as jnp
from jax import lax
from jax.experimental import pallas as pl
from jax.experimental.pallas import tpu as pltpu

LAYER_NORM_EPS = 1e-12  # BertLayerNorm default


def _round_up(x, m):
    return ((x + m - 1) // m) * m


def _lm_head_kernel(x_ref, wd_ref, bd_ref, g_ref, b_ref, wdec_ref, bias_ref,
                    out_ref, h_ref, *, eps):
    # INVARIANT: the vocab axis must be the innermost grid dimension and be
    # marked "arbitrary" -- the h scratch written on j==0 is reused by every
    # subsequent vocab tile of the same row tile.  Do not reorder the grid or
    # mark axis 1 "parallel".
    @pl.when(pl.program_id(1) == 0)
    def _():
        x = x_ref[...]  # native dtype (bf16/f32) straight to the MXU
        h = jnp.dot(x, wd_ref[...], preferred_element_type=jnp.float32)
        h = h + bd_ref[...].astype(jnp.float32)            # [tm, H] + [1, H]

        # exact (erf) GELU, matching transformers' `gelu`, in f32
        inv_sqrt2 = jnp.float32(0.7071067811865476)
        h = 0.5 * h * (1.0 + lax.erf(h * inv_sqrt2))

        # LayerNorm over hidden axis, statistics in f32 (eps = 1e-12 semantics)
        mu = jnp.mean(h, axis=-1, keepdims=True)
        xc = h - mu
        var = jnp.mean(xc * xc, axis=-1, keepdims=True)
        h = xc * lax.rsqrt(var + jnp.float32(eps))
        h = h * g_ref[...].astype(jnp.float32) + b_ref[...].astype(jnp.float32)

        # single cast into the decoder's operand dtype; reused by all vocab tiles
        h_ref[...] = h.astype(h_ref.dtype)

    # ---- decoder matmul for this vocab tile ---------------------------------
    logits = jnp.dot(h_ref[...], wdec_ref[...],
                     preferred_element_type=jnp.float32)
    logits = logits + bias_ref[...].astype(jnp.float32)    # [tm, tv] + [1, tv]
    out_ref[...] = logits.astype(out_ref.dtype)


def prepare_params(params, *, param_dtype=jnp.bfloat16, vocab_tile=2048,
                   lane_pad=128):
    """One-time parameter prep (do this at load time, NOT per forward call).

    * nn.Linear stores weight as [out, in]; transpose to [in, out] once.
    * The two big matmul weights are cast to `param_dtype` (bf16 by default):
      halves W_dec streaming bytes and runs the MXU at full bf16 rate.  Pass
      param_dtype=jnp.float32 (or None) for bit-accurate f32 math.
    * The vocab dimension is zero-padded to a lane-dense multiple of 128 (and
      of `vocab_tile` when V > vocab_tile) so real RoBERTa vocab sizes
      (e.g. 50265) run with unmasked lane-dense output stores.
    """
    dense_w = jnp.asarray(params["dense_w"])      # [H, H]  (PyTorch [out, in])
    decoder_w = jnp.asarray(params["decoder_w"])  # [V, H]
    if param_dtype is not None:
        dense_w = dense_w.astype(param_dtype)
        decoder_w = decoder_w.astype(param_dtype)

    V = decoder_w.shape[0]
    wdec_t = decoder_w.T                          # [H, V]
    bias = jnp.asarray(params["bias"])            # [V]

    # Lane-dense padding; also make Vp divisible by the vocab tile.
    Vp = _round_up(V, lane_pad)
    if Vp > vocab_tile:
        Vp = _round_up(Vp, vocab_tile)
    if Vp != V:
        wdec_t = jnp.pad(wdec_t, ((0, 0), (0, Vp - V)))
        bias = jnp.pad(bias, (0, Vp - V))

    return {
        "dense_wT": dense_w.T,                            # [H, H]
        "dense_b": jnp.asarray(params["dense_b"])[None, :],   # [1, H]
        "ln_gamma": jnp.asarray(params["ln_gamma"])[None, :],  # [1, H]
        "ln_beta": jnp.asarray(params["ln_beta"])[None, :],    # [1, H]
        "decoder_wT": wdec_t,                             # [H, Vp]
        "bias": bias[None, :],                            # [1, Vp]
        "vocab_size": int(V),
        "vocab_tile": int(min(vocab_tile, Vp)),
    }


def roberta_lm_head(features, prepared, *, row_tile=512, eps=LAYER_NORM_EPS,
                    out_dtype=None, vmem_limit_bytes=48 * 1024 * 1024):
    """features: [B, S, H] -> logits [B, S, V].

    `prepared` must come from prepare_params().

    Tuning:
      * row_tile (tm) is the roofline knob: decoder arithmetic intensity on
        the streamed W_dec slab is tm FLOP/byte.  Use >=512 on v6e/v7x,
        >=256 on v5e.  It is clamped so the parallel row axis keeps >=2 tiles
        (v7x megacore) when the row count allows it.
      * vocab_tile is fixed at prepare_params() time (default 2048) -- it does
        not change arithmetic intensity, only per-grid-step overhead.
      * Pass out_dtype=jnp.bfloat16 to halve the logits writeback stream
        (recommended when the consumer is a bf16/softmax-xent loss).
    """
    B, S, H = features.shape
    N = B * S

    wd = prepared["dense_wT"]        # [H, H]
    bd = prepared["dense_b"]         # [1, H]
    g = prepared["ln_gamma"]         # [1, H]
    b = prepared["ln_beta"]          # [1, H]
    wdec = prepared["decoder_wT"]    # [H, Vp]
    bias = prepared["bias"]          # [1, Vp]
    V = prepared["vocab_size"]
    Vp = wdec.shape[1]
    tv = min(prepared["vocab_tile"], Vp)
    assert Vp % tv == 0  # guaranteed by prepare_params

    if out_dtype is None:
        out_dtype = features.dtype

    x2d = features.reshape(N, H)
    # Feed the dense matmul in the weight's (possibly bf16) dtype.
    if jnp.dtype(wd.dtype).itemsize < jnp.dtype(x2d.dtype).itemsize:
        x2d = x2d.astype(wd.dtype)

    # ---- row tile selection --------------------------------------------------
    tm = min(row_tile, _round_up(N, 8))
    if N >= 512:
        # Keep at least 2 row tiles so the "parallel" axis can shard across the
        # 2 TensorCores of a v7x chip (harmless on single-TC v5e/v6e).
        tm = min(tm, _round_up(pl.cdiv(N, 2), 256))
    Np = _round_up(N, tm)
    if Np != N:
        # Zero rows are safe through dense/GELU/LN (eps keeps rsqrt finite);
        # the padded rows are sliced off below.
        x2d = jnp.pad(x2d, ((0, Np - N), (0, 0)))

    grid = (Np // tm, Vp // tv)

    # h scratch lives in the decoder operand dtype so the cast happens once.
    compute_dtype = wdec.dtype

    kernel = functools.partial(_lm_head_kernel, eps=eps)

    def _nbytes(a):
        return a.size * jnp.dtype(a.dtype).itemsize

    out_itemsize = jnp.dtype(out_dtype).itemsize
    n_row_tiles = Np // tm
    cost = pl.CostEstimate(
        flops=2 * Np * H * H + 2 * Np * H * Vp,
        transcendentals=Np * H,  # erf
        bytes_accessed=(
            _nbytes(x2d) + _nbytes(wd)
            # W_dec (and its bias) are streamed once per row tile.
            + n_row_tiles * (_nbytes(wdec) + _nbytes(bias))
            + _nbytes(bd) + _nbytes(g) + _nbytes(b)
            + Np * Vp * out_itemsize),
    )

    # TODO(synk): if VMEM gets tight on v7x (f32 logits + very large tm), move
    # the dense H*H weight to memory_space=pl.ANY and DMA it into a
    # pl.run_scoped VMEM buffer under pl.when(j == 0) so it isn't resident for
    # the whole kernel.

    out = pl.pallas_call(
        kernel,
        out_shape=jax.ShapeDtypeStruct((Np, Vp), out_dtype),
        grid_spec=pltpu.PrefetchScalarGridSpec(
            num_scalar_prefetch=0,
            grid=grid,
            in_specs=[
                pl.BlockSpec((tm, H), lambda i, j: (i, 0)),   # x rows
                pl.BlockSpec((H, H), lambda i, j: (0, 0)),    # dense W^T
                pl.BlockSpec((1, H), lambda i, j: (0, 0)),    # dense b
                pl.BlockSpec((1, H), lambda i, j: (0, 0)),    # LN gamma
                pl.BlockSpec((1, H), lambda i, j: (0, 0)),    # LN beta
                pl.BlockSpec((H, tv), lambda i, j: (0, j)),   # decoder W^T tile
                pl.BlockSpec((1, tv), lambda i, j: (0, j)),   # decoder bias tile
            ],
            out_specs=pl.BlockSpec((tm, tv), lambda i, j: (i, j)),
            scratch_shapes=[pltpu.VMEM((tm, H), compute_dtype)],
        ),
        compiler_params=pltpu.CompilerParams(
            # Rows shard across TensorCores; vocab MUST stay innermost +
            # "arbitrary" (h scratch persists across it).
            dimension_semantics=("parallel", "arbitrary"),
            vmem_limit_bytes=vmem_limit_bytes),
        cost_estimate=cost,
    )(x2d, wd, bd, g, b, wdec, bias)

    return out[:N, :V].reshape(B, S, V)


def init_params(key, hidden_size, vocab_size, dtype=jnp.float32):
    """PyTorch-layout parameters (Linear weights are [out, in])."""
    k1, k2, _ = jax.random.split(key, 3)
    scale = 0.02
    return {
        "dense_w": scale * jax.random.normal(k1, (hidden_size, hidden_size), dtype),
        "dense_b": jnp.zeros((hidden_size,), dtype),
        "ln_gamma": jnp.ones((hidden_size,), dtype),
        "ln_beta": jnp.zeros((hidden_size,), dtype),
        "decoder_w": scale * jax.random.normal(k2, (vocab_size, hidden_size), dtype),
        "bias": jnp.zeros((vocab_size,), dtype),
    }


def _reference(features, params, eps=LAYER_NORM_EPS):
    x = features @ params["dense_w"].T + params["dense_b"]
    x = jax.nn.gelu(x, approximate=False)
    mu = jnp.mean(x, axis=-1, keepdims=True)
    var = jnp.mean((x - mu) ** 2, axis=-1, keepdims=True)
    x = (x - mu) / jnp.sqrt(var + eps)
    x = x * params["ln_gamma"] + params["ln_beta"]
    return x @ params["decoder_w"].T + params["bias"]


if __name__ == "__main__":
    key = jax.random.PRNGKey(0)
    kx, kp = jax.random.split(key)

    # Deliberately ragged small shapes: N = 2*7 = 14 (row padding path) and
    # vocab = 200 (not a multiple of 128 -> vocab padding path).
    batch, seq, hidden, vocab = 2, 7, 32, 200
    features = jax.random.normal(kx, (batch, seq, hidden), jnp.float32)
    params = init_params(kp, hidden, vocab)
    ref = _reference(features, params)

    # 1) Bit-accurate f32 path (param_dtype=f32), tight tolerance.
    prepared_f32 = prepare_params(params, param_dtype=jnp.float32)
    out = jax.block_until_ready(roberta_lm_head(features, prepared_f32))
    assert out.shape == (batch, seq, vocab)
    assert jnp.allclose(out, ref, atol=1e-4, rtol=1e-4), "f32 mismatch vs reference"

    # 2) Production path: bf16 weights (default) + bf16 logits, loose tolerance.
    prepared_bf16 = prepare_params(params)
    out_bf16 = jax.block_until_ready(
        roberta_lm_head(features, prepared_bf16, out_dtype=jnp.bfloat16))
    assert out_bf16.shape == (batch, seq, vocab)
    assert out_bf16.dtype == jnp.bfloat16
    assert jnp.allclose(out_bf16.astype(jnp.float32), ref, atol=3e-2, rtol=3e-2), \
        "bf16 mismatch vs reference"

    print("KERNEL_OK")
</pallas_src>

<mosaic_0001>
module attributes {stable_mosaic.version = 11 : i64} {
  func.func @_lm_head_kernel(%arg0: i32, %arg1: i32, %arg2: memref<16x32xf32, #tpu.memory_space<vmem>>, %arg3: memref<32x32xf32, #tpu.memory_space<vmem>>, %arg4: memref<1x32xf32, #tpu.memory_space<vmem>>, %arg5: memref<1x32xf32, #tpu.memory_space<vmem>>, %arg6: memref<1x32xf32, #tpu.memory_space<vmem>>, %arg7: memref<32x256xf32, #tpu.memory_space<vmem>>, %arg8: memref<1x256xf32, #tpu.memory_space<vmem>>, %arg9: memref<16x256xf32, #tpu.memory_space<vmem>>, %arg10: memref<16x32xf32, #tpu.memory_space<vmem>>) attributes {dimension_semantics = [#tpu.dimension_semantics<parallel>, #tpu.dimension_semantics<arbitrary>], iteration_bounds = array<i64: 1, 1>, scalar_prefetch = 0 : i64, scratch_operands = 1 : i64, tpu.core_type = #tpu.core_type<tc>, window_params = [{transform_indices = @transform_0, window_bounds = array<i64: 16, 32>}, {pipeline_mode = #tpu.pipeline_mode<synchronous>, transform_indices = @transform_1, window_bounds = array<i64: 32, 32>}, {pipeline_mode = #tpu.pipeline_mode<synchronous>, transform_indices = @transform_2, window_bounds = array<i64: 1, 32>}, {pipeline_mode = #tpu.pipeline_mode<synchronous>, transform_indices = @transform_3, window_bounds = array<i64: 1, 32>}, {pipeline_mode = #tpu.pipeline_mode<synchronous>, transform_indices = @transform_4, window_bounds = array<i64: 1, 32>}, {transform_indices = @transform_5, window_bounds = array<i64: 32, 256>}, {transform_indices = @transform_6, window_bounds = array<i64: 1, 256>}, {transform_indices = @transform_7, window_bounds = array<i64: 16, 256>}]} {
    %c0_i32 = arith.constant 0 : i32
    %0 = arith.cmpi eq, %arg1, %c0_i32 : i32
    %1 = arith.extui %0 : i1 to i32
    %c0_i32_0 = arith.constant 0 : i32
    %2 = arith.cmpi ne, %1, %c0_i32_0 : i32
    scf.if %2 {
      %c0_8 = arith.constant 0 : index
      %c0_9 = arith.constant 0 : index
      %10 = vector.load %arg2[%c0_8, %c0_9] : memref<16x32xf32, #tpu.memory_space<vmem>>, vector<16x32xf32>
      %c0_10 = arith.constant 0 : index
      %c0_11 = arith.constant 0 : index
      %11 = vector.load %arg3[%c0_10, %c0_11] : memref<32x32xf32, #tpu.memory_space<vmem>>, vector<32x32xf32>
      %cst_12 = arith.constant dense<0.000000e+00> : vector<16x32xf32>
      %12 = tpu.matmul %10, %11, %cst_12 {dimension_numbers = #tpu.dot_dimension_numbers<[1], [0], [0], [1], [0, 0, 1, 1], [], []>} : vector<16x32xf32>, vector<32x32xf32>, vector<16x32xf32> -> vector<16x32xf32>
      %c0_13 = arith.constant 0 : index
      %c0_14 = arith.constant 0 : index
      %13 = vector.load %arg4[%c0_13, %c0_14] : memref<1x32xf32, #tpu.memory_space<vmem>>, vector<1x32xf32>
      %14 = vector.broadcast %13 : vector<1x32xf32> to vector<16x32xf32>
      %15 = arith.addf %12, %14 : vector<16x32xf32>
      %cst_15 = arith.constant 5.000000e-01 : f32
      %16 = vector.broadcast %cst_15 : f32 to vector<16x32xf32>
      %17 = arith.mulf %16, %15 : vector<16x32xf32>
      %cst_16 = arith.constant 0.707106769 : f32
      %18 = vector.broadcast %cst_16 : f32 to vector<16x32xf32>
      %19 = arith.mulf %15, %18 : vector<16x32xf32>
      %20 = math.erf %19 : vector<16x32xf32>
      %cst_17 = arith.constant 1.000000e+00 : f32
      %21 = vector.broadcast %cst_17 : f32 to vector<16x32xf32>
      %22 = arith.addf %21, %20 : vector<16x32xf32>
      %23 = arith.mulf %17, %22 : vector<16x32xf32>
      %cst_18 = arith.constant dense<0.000000e+00> : vector<16xf32>
      %24 = vector.multi_reduction <add>, %23, %cst_18 [1] : vector<16x32xf32> to vector<16xf32>
      %25 = vector.shape_cast %24 : vector<16xf32> to vector<16x1xf32>
      %cst_19 = arith.constant 3.200000e+01 : f32
      %26 = vector.broadcast %cst_19 : f32 to vector<16x1xf32>
      %27 = arith.divf %25, %26 : vector<16x1xf32>
      %28 = vector.broadcast %27 : vector<16x1xf32> to vector<16x32xf32>
      %29 = arith.subf %23, %28 : vector<16x32xf32>
      %30 = arith.mulf %29, %29 : vector<16x32xf32>
      %cst_20 = arith.constant dense<0.000000e+00> : vector<16xf32>
      %31 = vector.multi_reduction <add>, %30, %cst_20 [1] : vector<16x32xf32> to vector<16xf32>
      %32 = vector.shape_cast %31 : vector<16xf32> to vector<16x1xf32>
      %cst_21 = arith.constant 3.200000e+01 : f32
      %33 = vector.broadcast %cst_21 : f32 to vector<16x1xf32>
      %34 = arith.divf %32, %33 : vector<16x1xf32>
      %cst_22 = arith.constant 9.99999996E-13 : f32
      %35 = vector.broadcast %cst_22 : f32 to vector<16x1xf32>
      %36 = arith.addf %34, %35 : vector<16x1xf32>
      %37 = math.rsqrt %36 : vector<16x1xf32>
      %38 = vector.broadcast %37 : vector<16x1xf32> to vector<16x32xf32>
      %39 = arith.mulf %29, %38 : vector<16x32xf32>
      %c0_23 = arith.constant 0 : index
      %c0_24 = arith.constant 0 : index
      %40 = vector.load %arg5[%c0_23, %c0_24] : memref<1x32xf32, #tpu.memory_space<vmem>>, vector<1x32xf32>
      %41 = vector.broadcast %40 : vector<1x32xf32> to vector<16x32xf32>
      %42 = arith.mulf %39, %41 : vector<16x32xf32>
      %c0_25 = arith.constant 0 : index
      %c0_26 = arith.constant 0 : index
      %43 = vector.load %arg6[%c0_25, %c0_26] : memref<1x32xf32, #tpu.memory_space<vmem>>, vector<1x32xf32>
      %44 = vector.broadcast %43 : vector<1x32xf32> to vector<16x32xf32>
      %45 = arith.addf %42, %44 : vector<16x32xf32>
      %c0_27 = arith.constant 0 : index
      %c0_28 = arith.constant 0 : index
      %46 = vector.load %arg10[%c0_27, %c0_28] : memref<16x32xf32, #tpu.memory_space<vmem>>, vector<16x32xf32>
      tpu.vector_store %arg10[%c0_27, %c0_28], %45 {strides = array<i32>} : memref<16x32xf32, #tpu.memory_space<vmem>>, vector<16x32xf32>,
    } else {
    }
    %c0 = arith.constant 0 : index
    %c0_1 = arith.constant 0 : index
    %3 = vector.load %arg10[%c0, %c0_1] : memref<16x32xf32, #tpu.memory_space<vmem>>, vector<16x32xf32>
    %c0_2 = arith.constant 0 : index
    %c0_3 = arith.constant 0 : index
    %4 = vector.load %arg7[%c0_2, %c0_3] : memref<32x256xf32, #tpu.memory_space<vmem>>, vector<32x256xf32>
    %cst = arith.constant dense<0.000000e+00> : vector<16x256xf32>
    %5 = tpu.matmul %3, %4, %cst {dimension_numbers = #tpu.dot_dimension_numbers<[1], [0], [0], [1], [0, 0, 1, 1], [], []>} : vector<16x32xf32>, vector<32x256xf32>, vector<16x256xf32> -> vector<16x256xf32>
    %c0_4 = arith.constant 0 : index
    %c0_5 = arith.constant 0 : index
    %6 = vector.load %arg8[%c0_4, %c0_5] : memref<1x256xf32, #tpu.memory_space<vmem>>, vector<1x256xf32>
    %7 = vector.broadcast %6 : vector<1x256xf32> to vector<16x256xf32>
    %8 = arith.addf %5, %7 : vector<16x256xf32>
    %c0_6 = arith.constant 0 : index
    %c0_7 = arith.constant 0 : index
    %9 = vector.load %arg9[%c0_6, %c0_7] : memref<16x256xf32, #tpu.memory_space<vmem>>, vector<16x256xf32>
    tpu.vector_store %arg9[%c0_6, %c0_7], %8 {strides = array<i32>} : memref<16x256xf32, #tpu.memory_space<vmem>>, vector<16x256xf32>,
    return
  }
  func.func @transform_0(%arg0: i32, %arg1: i32) -> (i32, i32) {
    %c0_i32 = arith.constant 0 : i32
    %c0_i32_0 = arith.constant 0 : i32
    return %arg0, %c0_i32 : i32, i32
  }
  func.func @transform_1(%arg0: i32, %arg1: i32) -> (i32, i32) {
    %c0_i32 = arith.constant 0 : i32
    %c0_i32_0 = arith.constant 0 : i32
    %c0_i32_1 = arith.constant 0 : i32
    return %c0_i32, %c0_i32_0 : i32, i32
  }
  func.func @transform_2(%arg0: i32, %arg1: i32) -> (i32, i32) {
    %c0_i32 = arith.constant 0 : i32
    %c0_i32_0 = arith.constant 0 : i32
    %c0_i32_1 = arith.constant 0 : i32
    return %c0_i32, %c0_i32_0 : i32, i32
  }
  func.func @transform_3(%arg0: i32, %arg1: i32) -> (i32, i32) {
    %c0_i32 = arith.constant 0 : i32
    %c0_i32_0 = arith.constant 0 : i32
    %c0_i32_1 = arith.constant 0 : i32
    return %c0_i32, %c0_i32_0 : i32, i32
  }
  func.func @transform_4(%arg0: i32, %arg1: i32) -> (i32, i32) {
    %c0_i32 = arith.constant 0 : i32
    %c0_i32_0 = arith.constant 0 : i32
    %c0_i32_1 = arith.constant 0 : i32
    return %c0_i32, %c0_i32_0 : i32, i32
  }
  func.func @transform_5(%arg0: i32, %arg1: i32) -> (i32, i32) {
    %c0_i32 = arith.constant 0 : i32
    %c0_i32_0 = arith.constant 0 : i32
    return %c0_i32, %arg1 : i32, i32
  }
  func.func @transform_6(%arg0: i32, %arg1: i32) -> (i32, i32) {
    %c0_i32 = arith.constant 0 : i32
    %c0_i32_0 = arith.constant 0 : i32
    return %c0_i32, %arg1 : i32, i32
  }
  func.func @transform_7(%arg0: i32, %arg1: i32) -> (i32, i32) {
    %c0_i32 = arith.constant 0 : i32
    return %arg0, %arg1 : i32, i32
  }
}

</mosaic_0001>

<llo_original>
// kernel: tpu_custom_call.1
$region0: #{tpu_custom_call.1}
  #allocation0 [shape = 'u32[]', space=smem, size = 0x4, offset = 0x4, fixed_abs, tag = 'smem constant byte address 0x4 - core index']
  #allocation1 [shape = 'u32[144,128]{1,0:T(1,128)}', space=vmem, size = 0x12000, scoped, tag = 'internal scratch']
  #allocation2 [shape = 'f32[16,32]{1,0:T(8,128)}', space=vmem, size = 0x2000, scoped, tag = 'scratch operand']
  %s0 = inlined_call_operand.hbm [shape: f32[16,32], index: 0, kind: input, shape index: {}]
  %s1 = inlined_call_operand.hbm [shape: f32[32,32], index: 1, kind: input, shape index: {}]
  %s2 = inlined_call_operand.vmem [shape: f32[1,32], index: 2, kind: input, shape index: {}]
  %s3 = inlined_call_operand.vmem [shape: f32[1,32], index: 3, kind: input, shape index: {}]
  %s4 = inlined_call_operand.vmem [shape: f32[1,32], index: 4, kind: input, shape index: {}]
  %s5 = inlined_call_operand.hbm [shape: f32[32,256], index: 5, kind: input, shape index: {}]
  %s6 = inlined_call_operand.vmem [shape: f32[1,256], index: 6, kind: input, shape index: {}]
  %s7 = inlined_call_operand.hbm [shape: f32[16,256], index: 7, kind: output, shape index: {}]
  %s8 = sld [smem:[#allocation0]]
  $region54: #{tpu_custom_call.1} parent=0
    _
  %s10 = ssub.s32 1, %s8
  %s11 = scalar_select 0, %s10, %s8
  $region1: #{tpu_custom_call.1} parent=0
    #allocation3 [shape = 'u8[8192]{0}', space=vmem, size = 0x2000, scoped, tag = 'input window, operand 0, single buffered']
    #allocation4 [shape = 's32[1]{0}', space=sflag, size = 0x4, scoped, tag = 'scoped memory for tpu_custom_call.1']
    #allocation5 [shape = 's32[1]{0}', space=sflag, size = 0x4, scoped, tag = 'scoped memory for tpu_custom_call.1']
    #allocation6 [shape = 'u8[16384]{0}', space=vmem, size = 0x4000, scoped, tag = 'input window, operand 1, single buffered']
    #allocation7 [shape = 's32[1]{0}', space=sflag, size = 0x4, scoped, tag = 'scoped memory for tpu_custom_call.1']
    #allocation8 [shape = 'u8[32768]{0}', space=vmem, size = 0x8000, scoped, tag = 'input window, operand 5, single buffered']
    #allocation9 [shape = 'u8[16384]{0}', space=vmem, size = 0x4000, scoped, tag = 'output window, operand 0, single buffered']
    %12 = vsyncpa [#allocation4], 0
    %13 = vsyncpa [#allocation7], 0
    %14 = vsyncpa [#allocation5], 0
    // Predicated region
    $region2: #{tpu_custom_call.1} parent=1 // pred_check
      _
    $region3: #{tpu_custom_call.1} parent=1 // pred_check_branch
      %16 = sbr.rel (0) target = $region5
    $region4: #{tpu_custom_call.1} parent=1 // pred_region
      %s18 = ssub.s32 256, 256
      %19 = vsyncadd [#allocation4], %s18
      %s20 = sshll.u32 [#allocation3], 4
      %s21 = int_to_ptr.vmem [resolvable:$true] %s20
      %26 = dma.hbm_to_vmem [thread:$0]  %s0, 256, %s21, [#allocation4], 128, 128, 8
    $region5: #{tpu_custom_call.1} parent=1 // pred_fallthru
      _
    // Predicated region
    $region6: #{tpu_custom_call.1} parent=1 // pred_check
      _
    $region7: #{tpu_custom_call.1} parent=1 // pred_check_branch
      %28 = sbr.rel (0) target = $region9
    $region8: #{tpu_custom_call.1} parent=1 // pred_region
      %s30 = ssub.s32 512, 512
      %31 = vsyncadd [#allocation7], %s30
      %s32 = sshll.u32 [#allocation6], 4
      %s33 = int_to_ptr.vmem [resolvable:$true] %s32
      %38 = dma.hbm_to_vmem [thread:$0]  %s1, 512, %s33, [#allocation7], 128, 128, 8
    $region9: #{tpu_custom_call.1} parent=1 // pred_fallthru
      _
    // Predicated region
    $region10: #{tpu_custom_call.1} parent=1 // pred_check
      _
    $region11: #{tpu_custom_call.1} parent=1 // pred_check_branch
      %40 = sbr.rel (0) target = $region13
    $region12: #{tpu_custom_call.1} parent=1 // pred_region
      _
    $region13: #{tpu_custom_call.1} parent=1 // pred_fallthru
      _
    // Predicated region
    $region14: #{tpu_custom_call.1} parent=1 // pred_check
      _
    $region15: #{tpu_custom_call.1} parent=1 // pred_check_branch
      %42 = sbr.rel (0) target = $region17
    $region16: #{tpu_custom_call.1} parent=1 // pred_region
      _
    $region17: #{tpu_custom_call.1} parent=1 // pred_fallthru
      _
    // Predicated region
    $region18: #{tpu_custom_call.1} parent=1 // pred_check
      _
    $region19: #{tpu_custom_call.1} parent=1 // pred_check_branch
      %44 = sbr.rel (0) target = $region21
    $region20: #{tpu_custom_call.1} parent=1 // pred_region
      _
    $region21: #{tpu_custom_call.1} parent=1 // pred_fallthru
      _
    // Predicated region
    $region22: #{tpu_custom_call.1} parent=1 // pred_check
      _
    $region23: #{tpu_custom_call.1} parent=1 // pred_check_branch
      %46 = sbr.rel (0) target = $region25
    $region24: #{tpu_custom_call.1} parent=1 // pred_region
      %s48 = ssub.s32 1024, 1024
      %49 = vsyncadd [#allocation7], %s48
      %s50 = sshll.u32 [#allocation8], 4
      %s51 = int_to_ptr.vmem [resolvable:$true] %s50
      %56 = dma.hbm_to_vmem [thread:$0]  %s5, 1024, %s51, [#allocation7], 256, 256, 16
    $region25: #{tpu_custom_call.1} parent=1 // pred_fallthru
      _
    // Predicated region
    $region26: #{tpu_custom_call.1} parent=1 // pred_check
      _
    $region27: #{tpu_custom_call.1} parent=1 // pred_check_branch
      %58 = sbr.rel (0) target = $region29
    $region28: #{tpu_custom_call.1} parent=1 // pred_region
      _
    $region29: #{tpu_custom_call.1} parent=1 // pred_fallthru
      _
    // Predicated region
    $region30: #{tpu_custom_call.1} parent=1 // pred_check
      _
    $region31: #{tpu_custom_call.1} parent=1 // pred_check_branch
      %60 = sbr.rel (0) target = $region33
    $region32: #{tpu_custom_call.1} parent=1 // pred_region
      %61 = dma.done [#allocation4], 256
    $region33: #{tpu_custom_call.1} parent=1 // pred_fallthru
      _
    // Predicated region
    $region34: #{tpu_custom_call.1} parent=1 // pred_check
      _
    $region35: #{tpu_custom_call.1} parent=1 // pred_check_branch
      %63 = sbr.rel (0) target = $region37
    $region36: #{tpu_custom_call.1} parent=1 // pred_region
      %64 = dma.done [#allocation7], 512
    $region37: #{tpu_custom_call.1} parent=1 // pred_fallthru
      _
    // Predicated region
    $region38: #{tpu_custom_call.1} parent=1 // pred_check
      _
    $region39: #{tpu_custom_call.1} parent=1 // pred_check_branch
      %66 = sbr.rel (0) target = $region41
    $region40: #{tpu_custom_call.1} parent=1 // pred_region
      %67 = dma.done [#allocation7], 1024
    $region41: #{tpu_custom_call.1} parent=1 // pred_fallthru
      _
    %p68 = scmp.eq.s32.totalorder 0, 0
    // Predicated region
    $region42: #{tpu_custom_call.1} parent=1 // pred_check
      %p69 = pneg %p68
    $region43: #{tpu_custom_call.1} parent=1 // pred_check_branch
      %71 = sbr.rel (%p69) target = $region45
    $region44: #{tpu_custom_call.1} parent=1 // pred_region
      %v72 = vld [vmem:[#allocation3] sm:$0xff]
      %v73 = vld [vmem:[#allocation3 + $0x8] sm:$0xff]
      %v74 = vld [vmem:[#allocation6] sm:$0xff]
      %v75 = vld [vmem:[#allocation6 + $0x8] sm:$0xff]
      %v76 = vld [vmem:[#allocation6 + $0x10] sm:$0xff]
      %v77 = vld [vmem:[#allocation6 + $0x18] sm:$0xff]
      %v78 = vld [vmem:[%s2] sm:$0x1]
      %v80 = vlaneseq
      %v81 = vshrl.u32 %v80, 7
      %v82 = vsub.s32 0, %v81
      %v83 = vrot.slane %v78, %v82
      %vm85 = vcmask 261120
      %v87 = vsel %vm85, %v72, 0
      %v90 = vsel %vm85, %v73, 0
      %92 = vmatprep.subr.mxu0 0.0
      %93 = vmatpush1.msra.mxu0 %v74
      %94 = vmatprep.subr.mxu0 0.0
      %95 = vmatpush1.msra.mxu0 %v75
      %96 = vmatprep.subr.mxu0 0.0
      %97 = vmatpush1.msra.mxu0 %v76
      %98 = vmatprep.subr.mxu0 0.0
      %99 = vmatpush1.msra.mxu0 %v77
      %100 = vmatprep.subr.mxu0 0.0
      %101 = vmatpush1.msra.mxu0 0.0
      %102 = vmatprep.subr.mxu0 0.0
      %103 = vmatpush1.msra.mxu0 0.0
      %104 = vmatprep.subr.mxu0 0.0
      %105 = vmatpush1.msra.mxu0 0.0
      %106 = vmatprep.subr.mxu0 0.0
      %107 = vmatpush1.msra.mxu0 0.0
      %108 = vmatprep.subr.mxu0 0.0
      %109 = vmatpush1.msra.mxu0 0.0
      %110 = vmatprep.subr.mxu0 0.0
      %111 = vmatpush1.msra.mxu0 0.0
      %112 = vmatprep.subr.mxu0 0.0
      %113 = vmatpush1.msra.mxu0 0.0
      %114 = vmatprep.subr.mxu0 0.0
      %115 = vmatpush1.msra.mxu0 0.0
      %116 = vmatprep.subr.mxu0 0.0
      %117 = vmatpush1.msra.mxu0 0.0
      %118 = vmatprep.subr.mxu0 0.0
      %119 = vmatpush1.msra.mxu0 0.0
      %120 = vmatprep.subr.mxu0 0.0
      %121 = vmatpush1.msra.mxu0 0.0
      %122 = vmatprep.subr.mxu0 0.0
      %123 = vmatpush1.msra.mxu0 0.0
      %124 = vmatprep.subr.mxu0 0.0
      %125 = vmatpush1.msra.mxu0 0.0
      %126 = vmatprep.subr.mxu0 0.0
      %127 = vmatpush1.msra.mxu0 0.0
      %128 = vmatprep.subr.mxu0 0.0
      %129 = vmatpush1.msra.mxu0 0.0
      %130 = vmatprep.subr.mxu0 0.0
      %131 = vmatpush1.msra.mxu0 0.0
      %132 = vmatprep.subr.mxu0 0.0
      %133 = vmatpush1.msra.mxu0 0.0
      %134 = vmatprep.subr.mxu0 0.0
      %135 = vmatpush1.msra.mxu0 0.0
      %136 = vmatprep.subr.mxu0 0.0
      %137 = vmatpush1.msra.mxu0 0.0
      %138 = vmatprep.subr.mxu0 0.0
      %139 = vmatpush1.msra.mxu0 0.0
      %140 = vmatprep.subr.mxu0 0.0
      %141 = vmatpush1.msra.mxu0 0.0
      %142 = vmatprep.subr.mxu0 0.0
      %143 = vmatpush1.msra.mxu0 0.0
      %144 = vmatprep.subr.mxu0 0.0
      %145 = vmatpush1.msra.mxu0 0.0
      %146 = vmatprep.subr.mxu0 0.0
      %147 = vmatpush1.msra.mxu0 0.0
      %148 = vmatprep.subr.mxu0 0.0
      %149 = vmatpush1.msra.mxu0 0.0
      %150 = vmatprep.subr.mxu0 0.0
      %151 = vmatpush1.msra.mxu0 0.0
      %152 = vmatprep.subr.mxu0 0.0
      %153 = vmatpush1.msra.mxu0 0.0
      %154 = vmatprep.subr.mxu0 0.0
      %155 = vmatpush1.msra.mxu0 0.0
      %156 = vmatprep.mubr.f32.mxu0 0.0
      %157 = vmatmul.mubr.f32.gmra.mrb[0].mxu0 %v87
      %v158 = vpop.f32.mrb[0].mxu0
      %v159 = vadd.f32 %v83, %v158
      %v160 = vpop.f32.mrb[0].mxu0
      %161 = vmatprep.mubr.f32.mxu0 0.0
      %162 = vmatmul.mubr.f32.gmra.mrb[0].mxu0 %v90
      %v163 = vpop.f32.mrb[0].mxu0
      %v164 = vadd.f32 %v83, %v163
      %v165 = vpop.f32.mrb[0].mxu0
      %166 = vdwg.mxu0
      %v167 = vmul.f32 %v159, 0.5
      %v168 = vmul.f32 %v164, 0.5
      %v169 = vmul.f32 %v159, 0.70710677
      %v170 = vmul.f32 %v164, 0.70710677
      %v171 = verf.f32.pop %v169
      %v172 = verf.f32.pop %v170
      %v173 = vadd.f32 %v171, 1.0
      %v174 = vadd.f32 %v172, 1.0
      %v175 = vmul.f32 %v167, %v173
      %v176 = vmul.f32 %v168, %v174
      %v177 = vsel %vm85, %v175, 0.0
      %178 = vadd.xlane.f32.xlu0 %v177
      %v179 = vpop.xlane.xlu0 %178
      %v180 = vsel %vm85, %v176, 0.0
      %181 = vadd.xlane.f32.xlu0 %v180
      %v182 = vpop.xlane.xlu0 %181
      %v183 = vrcp.pop 32.0
      %v184 = vmul.f32 %v179, %v183
      %v185 = vmul.f32 %v182, %v183
      %v186 = vsub.f32 %v175, %v184
      %v187 = vsub.f32 %v176, %v185
      %v188 = vmul.f32 %v186, %v186
      %v189 = vmul.f32 %v187, %v187
      %v190 = vsel %vm85, %v188, 0.0
      %191 = vadd.xlane.f32.xlu0 %v190
      %v192 = vpop.xlane.xlu0 %191
      %v193 = vsel %vm85, %v189, 0.0
      %194 = vadd.xlane.f32.xlu0 %v193
      %v195 = vpop.xlane.xlu0 %194
      %v196 = vmul.f32 %v192, %v183
      %v197 = vmul.f32 %v195, %v183
      %v198 = vadd.f32 %v196, 1e-12
      %v199 = vadd.f32 %v197, 1e-12
      %v200 = vrsqrt.pop %v198
      %v201 = vrsqrt.pop %v199
      %v202 = vmul.f32 %v186, %v200
      %v203 = vmul.f32 %v187, %v201
      %v204 = vld [vmem:[%s3] sm:$0x1]
      %v206 = vlaneseq
      %v207 = vshrl.u32 %v206, 7
      %v208 = vsub.s32 0, %v207
      %v209 = vrot.slane %v204, %v208
      %v211 = vmul.f32 %v202, %v209
      %v212 = vmul.f32 %v203, %v209
      %v213 = vld [vmem:[%s4] sm:$0x1]
      %v215 = vlaneseq
      %v216 = vshrl.u32 %v215, 7
      %v217 = vsub.s32 0, %v216
      %v218 = vrot.slane %v213, %v217
      %v220 = vadd.f32 %v211, %v218
      %v221 = vadd.f32 %v212, %v218
      %222 = vst.msk [vmem:[#allocation2] sm:$0xff] %vm85, %v220
      %223 = vst.msk [vmem:[#allocation2 + $0x8] sm:$0xff] %vm85, %v221
    $region45: #{tpu_custom_call.1} parent=1 // pred_fallthru
      _
    %v224 = vld [vmem:[#allocation2] sm:$0xff]
    %v225 = vld [vmem:[#allocation2 + $0x8] sm:$0xff]
    %v226 = vld [vmem:[#allocation8] sm:$0xff]
    %v227 = vld [vmem:[#allocation8 + $0x8] sm:$0xff]
    %v228 = vld [vmem:[#allocation8 + $0x10] sm:$0xff]
    %v229 = vld [vmem:[#allocation8 + $0x18] sm:$0xff]
    %v230 = vld [vmem:[#allocation8 + $0x20] sm:$0xff]
    %v231 = vld [vmem:[#allocation8 + $0x28] sm:$0xff]
    %v232 = vld [vmem:[#allocation8 + $0x30] sm:$0xff]
    %v233 = vld [vmem:[#allocation8 + $0x38] sm:$0xff]
    %v234 = vld [vmem:[%s6] sm:$0x3]
    %v236 = vlaneseq
    %v237 = vshrl.u32 %v236, 7
    %v238 = vsub.s32 0, %v237
    %v239 = vrot.slane %v234, %v238
    %v240 = vlaneseq
    %v241 = vshrl.u32 %v240, 7
    %v242 = vsub.s32 1, %v241
    %v243 = vrot.slane %v234, %v242
    %vm246 = vcmask 261120
    %v248 = vsel %vm246, %v224, 0
    %v251 = vsel %vm246, %v225, 0
    %253 = vmatprep.subr.mxu0 %v227
    %254 = vmatpush1.msra.mxu0 %v226
    %255 = vmatprep.subr.mxu0 %v229
    %256 = vmatpush1.msra.mxu0 %v228
    %257 = vmatprep.subr.mxu0 %v231
    %258 = vmatpush1.msra.mxu0 %v230
    %259 = vmatprep.subr.mxu0 %v233
    %260 = vmatpush1.msra.mxu0 %v232
    %261 = vmatprep.subr.mxu0 0.0
    %262 = vmatpush1.msra.mxu0 0.0
    %263 = vmatprep.subr.mxu0 0.0
    %264 = vmatpush1.msra.mxu0 0.0
    %265 = vmatprep.subr.mxu0 0.0
    %266 = vmatpush1.msra.mxu0 0.0
    %267 = vmatprep.subr.mxu0 0.0
    %268 = vmatpush1.msra.mxu0 0.0
    %269 = vmatprep.subr.mxu0 0.0
    %270 = vmatpush1.msra.mxu0 0.0
    %271 = vmatprep.subr.mxu0 0.0
    %272 = vmatpush1.msra.mxu0 0.0
    %273 = vmatprep.subr.mxu0 0.0
    %274 = vmatpush1.msra.mxu0 0.0
    %275 = vmatprep.subr.mxu0 0.0
    %276 = vmatpush1.msra.mxu0 0.0
    %277 = vmatprep.subr.mxu0 0.0
    %278 = vmatpush1.msra.mxu0 0.0
    %279 = vmatprep.subr.mxu0 0.0
    %280 = vmatpush1.msra.mxu0 0.0
    %281 = vmatprep.subr.mxu0 0.0
    %282 = vmatpush1.msra.mxu0 0.0
    %283 = vmatprep.subr.mxu0 0.0
    %284 = vmatpush1.msra.mxu0 0.0
    %285 = vmatprep.subr.mxu0 0.0
    %286 = vmatpush1.msra.mxu0 0.0
    %287 = vmatprep.subr.mxu0 0.0
    %288 = vmatpush1.msra.mxu0 0.0
    %289 = vmatprep.subr.mxu0 0.0
    %290 = vmatpush1.msra.mxu0 0.0
    %291 = vmatprep.subr.mxu0 0.0
    %292 = vmatpush1.msra.mxu0 0.0
    %293 = vmatprep.subr.mxu0 0.0
    %294 = vmatpush1.msra.mxu0 0.0
    %295 = vmatprep.subr.mxu0 0.0
    %296 = vmatpush1.msra.mxu0 0.0
    %297 = vmatprep.subr.mxu0 0.0
    %298 = vmatpush1.msra.mxu0 0.0
    %299 = vmatprep.subr.mxu0 0.0
    %300 = vmatpush1.msra.mxu0 0.0
    %301 = vmatprep.subr.mxu0 0.0
    %302 = vmatpush1.msra.mxu0 0.0
    %303 = vmatprep.subr.mxu0 0.0
    %304 = vmatpush1.msra.mxu0 0.0
    %305 = vmatprep.subr.mxu0 0.0
    %306 = vmatpush1.msra.mxu0 0.0
    %307 = vmatprep.subr.mxu0 0.0
    %308 = vmatpush1.msra.mxu0 0.0
    %309 = vmatprep.subr.mxu0 0.0
    %310 = vmatpush1.msra.mxu0 0.0
    %311 = vmatprep.subr.mxu0 0.0
    %312 = vmatpush1.msra.mxu0 0.0
    %313 = vmatprep.subr.mxu0 0.0
    %314 = vmatpush1.msra.mxu0 0.0
    %315 = vmatprep.subr.mxu0 0.0
    %316 = vmatpush1.msra.mxu0 0.0
    %317 = vmatprep.mubr.f32.mxu0 0.0
    %318 = vmatmul.mubr.f32.gmra.mrb[0].mxu0 %v248
    %v319 = vpop.f32.mrb[0].mxu0
    %v320 = vadd.f32 %v239, %v319
    %v321 = vpop.f32.mrb[0].mxu0
    %v322 = vadd.f32 %v243, %v321
    %323 = vmatprep.mubr.f32.mxu0 0.0
    %324 = vmatmul.mubr.f32.gmra.mrb[0].mxu0 %v251
    %v325 = vpop.f32.mrb[0].mxu0
    %v326 = vadd.f32 %v239, %v325
    %v327 = vpop.f32.mrb[0].mxu0
    %v328 = vadd.f32 %v243, %v327
    %329 = vdwg.mxu0
    %330 = vst [vmem:[#allocation9] sm:$0xff] %v320
    %331 = vst [vmem:[#allocation9 + $0x8] sm:$0xff] %v322
    %332 = vst [vmem:[#allocation9 + $0x10] sm:$0xff] %v326
    %333 = vst [vmem:[#allocation9 + $0x18] sm:$0xff] %v328
    // Predicated region
    $region46: #{tpu_custom_call.1} parent=1 // pred_check
      _
    $region47: #{tpu_custom_call.1} parent=1 // pred_check_branch
      %335 = sbr.rel (0) target = $region49
    $region48: #{tpu_custom_call.1} parent=1 // pred_region
      %s337 = ssub.s32 512, 512
      %338 = vsyncadd [#allocation5], %s337
      %s339 = sshll.u32 [#allocation9], 4
      %s340 = int_to_ptr.vmem [resolvable:$true] %s339
      %345 = dma.vmem_to_hbm [thread:$0]  %s340, 512, %s7, [#allocation5], 256, 256, 16
    $region49: #{tpu_custom_call.1} parent=1 // pred_fallthru
      _
    // Predicated region
    $region50: #{tpu_custom_call.1} parent=1 // pred_check
      _
    $region51: #{tpu_custom_call.1} parent=1 // pred_check_branch
      %347 = sbr.rel (0) target = $region53
    $region52: #{tpu_custom_call.1} parent=1 // pred_region
      %348 = dma.done [#allocation5], 512
    $region53: #{tpu_custom_call.1} parent=1 // pred_fallthru
      _
    %349 = vsyncpa [#allocation4], 1
    %350 = vsyncpa [#allocation7], 1
    %351 = vsyncpa [#allocation5], 1

</llo_original>
